<compile_context>
chip_gen: v6e
topology: v6e:2x2x1
jax: 0.10.0
libtpu: 0.0.40
codegen_flags: <defaults>
</compile_context>

<pallas_src>
import functools

import numpy as np
import jax
import jax.numpy as jnp
from jax import lax
from jax.experimental import pallas as pl
from jax.experimental.pallas import tpu as pltpu

_LANE = 128
_SUBLANE = 8
_MIN_TILE = _SUBLANE * _LANE  # 1024 positions = one (8, 128) f32 vreg


def _round_up(a, m):
    return (a + m - 1) // m * m


def _bin_dice_kernel(logs_ref, y_ref, tp_ref, yv_ref, pv_ref, *,
                     rows_tile, row_chunk, steps_per_chunk, mask_from, valid_s,
                     onehot_target):
    c = pl.program_id(1)          # spatial chunk (parallel; megacore on v7x)
    s = pl.program_id(2)          # step within chunk (arbitrary / accumulating)
    step = c * steps_per_chunk + s  # logical (unclamped) spatial step

    # Per-(batch, chunk) accumulators live in the revisited output blocks.
    @pl.when(s == 0)
    def _():
        tp_ref[...] = jnp.zeros_like(tp_ref)
        yv_ref[...] = jnp.zeros_like(yv_ref)
        pv_ref[...] = jnp.zeros_like(pv_ref)

    n_row_chunks = rows_tile // row_chunk

    def tile_sums(masked):
        def body(i, carry):
            tp, yv, pv = carry
            r0 = pl.multiple_of(i * row_chunk, row_chunk)
            x = logs_ref[0, :, pl.ds(r0, row_chunk), :].astype(jnp.float32)  # (C, rc, 128)

            # pred_fg = max_{c>=1} softmax_c = 1 / sum_c exp(x_c - max_{c>=1} x_c)
            # exp(x0 - m_fg) overflowing to inf drives pred_fg -> 0 (correct limit).
            m_fg = jnp.max(x[1:], axis=0)                               # (rc, 128)
            pred_fg = 1.0 / jnp.sum(jnp.exp(x - m_fg[None]), axis=0)    # exact divide

            if onehot_target:
                # Only channel 0 of the target is shipped from HBM (BlockSpec).
                y0 = y_ref[0, 0, pl.ds(r0, row_chunk), :].astype(jnp.float32)
                yb_fg = 1.0 - y0
            else:
                y = y_ref[0, :, pl.ds(r0, row_chunk), :].astype(jnp.float32)
                yb_fg = jnp.max(y[1:], axis=0)

            if masked:
                # Select-based masking (NOT multiply): garbage in ragged /
                # duplicated blocks may produce inf/nan that a multiply would keep.
                rr = lax.broadcasted_iota(jnp.int32, (row_chunk, _LANE), 0)
                ll = lax.broadcasted_iota(jnp.int32, (row_chunk, _LANE), 1)
                pos = (step * rows_tile + r0 + rr) * _LANE + ll
                keep = pos < valid_s
                pred_fg = jnp.where(keep, pred_fg, 0.0)
                yb_fg = jnp.where(keep, yb_fg, 0.0)

            def fold(v):  # (rc, 128) -> (8, 128): free retiling view + VPU adds
                return jnp.sum(v.reshape(row_chunk // _SUBLANE, _SUBLANE, _LANE),
                               axis=0)

            return (tp + fold(yb_fg * pred_fg), yv + fold(yb_fg), pv + fold(pred_fg))

        zero = jnp.zeros((_SUBLANE, _LANE), jnp.float32)
        unroll = True if n_row_chunks <= 16 else 8
        return lax.fori_loop(0, n_row_chunks, body, (zero, zero, zero),
                             unroll=unroll)

    def accumulate(sums):
        tp_t, yv_t, pv_t = sums
        tp_ref[0, 0] = tp_ref[0, 0] + tp_t
        yv_ref[0, 0] = yv_ref[0, 0] + yv_t
        pv_ref[0, 0] = pv_ref[0, 0] + pv_t

    if mask_from is None:
        accumulate(tile_sums(False))
    else:
        # Fast unmasked path for fully-valid tiles; the iota/compare/select mask
        # only runs on steps that can contain padding or duplicated blocks.
        @pl.when(step < mask_from)
        def _():
            accumulate(tile_sums(False))

        @pl.when(step >= mask_from)
        def _():
            accumulate(tile_sums(True))


def bin_dice_loss(logs, yb_oh, mask=None, eps=1e-5, *, onehot_target=True):
    # TODO(synk): optional `mask` argument not implemented (forward default is mask=None)
    assert mask is None
    assert logs.shape == yb_oh.shape
    N, C = logs.shape[0], logs.shape[1]
    assert C >= 2
    S = int(np.prod(logs.shape[2:]))

    logs_f = logs.reshape(N, C, S)
    yb_f = yb_oh.reshape(N, C, S)        # original dtype; no extra HBM cast pass

    # Pad only to the minimal (8 x 128) granule (usually a no-op for H*W images).
    S_pad = _round_up(S, _MIN_TILE)
    if S_pad != S:
        pad = [(0, 0), (0, 0), (0, S_pad - S)]
        logs_f = jnp.pad(logs_f, pad)
        yb_f = jnp.pad(yb_f, pad)

    rows = S_pad // _LANE                # multiple of 8
    logs_f = logs_f.reshape(N, C, rows, _LANE)
    yb_f = yb_f.reshape(N, C, rows, _LANE)

    # --- VMEM budget (explicit; fits v7x's 64 MiB physical / 32 MiB scoped) ----
    try:
        phys_vmem = pltpu.get_tpu_info().vmem_capacity_bytes
    except Exception:
        phys_vmem = 64 * 1024 * 1024
    vmem_limit = (24 * 1024 * 1024 if phys_vmem >= 128 * 1024 * 1024
                  else 20 * 1024 * 1024)
    tile_budget = vmem_limit - 6 * 1024 * 1024   # headroom for temps/scratch

    y_channels = 1 if onehot_target else C
    bytes_per_pos = 2 * (C * logs_f.dtype.itemsize           # double-buffered
                         + y_channels * yb_f.dtype.itemsize)
    cap_s = (tile_budget // bytes_per_pos) // (32 * _LANE) * (32 * _LANE)
    cap_s = max(_MIN_TILE, min(cap_s, 64 * 1024))
    cap_rows = cap_s // _LANE

    # --- spatial tiling: balanced tiles + parallel chunk axis for v7x ---------
    min_steps = pl.cdiv(rows, cap_rows)
    n_chunks = 1 if min_steps == 1 else 2           # 2nd TC on v7x; no-op v5e/v6e
    total_steps = _round_up(min_steps, n_chunks)
    steps_per_chunk = total_steps // n_chunks

    rows_tile = _round_up(pl.cdiv(rows, total_steps), _SUBLANE)
    rows_tile = min(rows_tile, rows, cap_rows)
    if rows_tile % 32 and _round_up(rows_tile, 32) <= min(rows, cap_rows):
        rows_tile = _round_up(rows_tile, 32)
    row_chunk = 32 if rows_tile % 32 == 0 else (16 if rows_tile % 16 == 0 else 8)

    last_block = pl.cdiv(rows, rows_tile) - 1
    tile_positions = rows_tile * _LANE
    assert total_steps * tile_positions < 2 ** 31   # int32 position index
    mask_from = None if total_steps * tile_positions == S else S // tile_positions

    def spatial_block(c, s):
        # Clamp duplicated trailing steps onto the last real block; their
        # contributions are fully masked out inside the kernel.
        return jnp.minimum(c * steps_per_chunk + s, last_block)

    logs_spec = pl.BlockSpec((1, C, rows_tile, _LANE),
                             lambda b, c, s: (b, 0, spatial_block(c, s), 0))
    y_spec = pl.BlockSpec((1, y_channels, rows_tile, _LANE),
                          lambda b, c, s: (b, 0, spatial_block(c, s), 0))
    acc_shape = jax.ShapeDtypeStruct((N, n_chunks, _SUBLANE, _LANE), jnp.float32)
    acc_spec = pl.BlockSpec((1, 1, _SUBLANE, _LANE), lambda b, c, s: (b, c, 0, 0))

    kernel = functools.partial(
        _bin_dice_kernel, rows_tile=rows_tile, row_chunk=row_chunk,
        steps_per_chunk=steps_per_chunk, mask_from=mask_from, valid_s=S,
        onehot_target=onehot_target)

    cost = pl.CostEstimate(
        flops=int(N * S * (3 * C + 4)),
        transcendentals=int(N * S * C),
        bytes_accessed=int(N * S * (C * logs_f.dtype.itemsize
                                    + y_channels * yb_f.dtype.itemsize)))

    tp, yv, pv = pl.pallas_call(
        kernel,
        out_shape=(acc_shape, acc_shape, acc_shape),
        grid_spec=pltpu.PrefetchScalarGridSpec(
            num_scalar_prefetch=0,
            grid=(N, n_chunks, steps_per_chunk),
            in_specs=[logs_spec, y_spec],
            out_specs=(acc_spec, acc_spec, acc_spec),
        ),
        compiler_params=pltpu.CompilerParams(
            dimension_semantics=("parallel", "parallel", "arbitrary"),
            vmem_limit_bytes=vmem_limit),
        cost_estimate=cost,
    )(logs_f, yb_f)

    # Tiny epilogue: fold chunk/sublane/lane partials, dice + mean.
    tp = jnp.sum(tp, axis=(1, 2, 3))
    yv = jnp.sum(yv, axis=(1, 2, 3))
    pv = jnp.sum(pv, axis=(1, 2, 3))
    dice = (tp + eps) / (0.5 * yv + 0.5 * pv + eps)
    return 1.0 - jnp.mean(dice)


def _reference(logs, yb_oh, eps=1e-5):
    pred = jax.nn.softmax(logs, axis=1)
    pred_fg = jnp.max(pred[:, 1:], axis=1)      # (N, H, W)
    yb_fg = jnp.max(yb_oh[:, 1:], axis=1)
    red = tuple(range(1, pred_fg.ndim))
    tp = jnp.sum(yb_fg * pred_fg, axis=red)
    yv = jnp.sum(yb_fg, axis=red)
    pv = jnp.sum(pred_fg, axis=red)
    dice = (tp + eps) / (0.5 * yv + 0.5 * pv + eps)
    return 1.0 - jnp.mean(dice)


if __name__ == "__main__":
    key = jax.random.PRNGKey(0)
    k1, k2 = jax.random.split(key)

    N, C, H, W = 2, 4, 16, 16
    logs = jax.random.normal(k1, (N, C, H, W), dtype=jnp.float32)
    labels = jax.random.randint(k2, (N, H, W), 0, C)
    yb_oh = jnp.transpose(jax.nn.one_hot(labels, C, dtype=jnp.float32),
                          (0, 3, 1, 2))                       # NCHW

    loss = bin_dice_loss(logs, yb_oh)
    loss = jax.block_until_ready(loss)

    ref = jax.block_until_ready(_reference(logs, yb_oh))
    np.testing.assert_allclose(np.asarray(loss), np.asarray(ref),
                               rtol=1e-5, atol=1e-5)
    print("KERNEL_OK")
</pallas_src>

<mosaic_0001>
module attributes {stable_mosaic.version = 11 : i64} {
  func.func @_bin_dice_kernel(%arg0: i32, %arg1: i32, %arg2: i32, %arg3: memref<1x4x8x128xf32, #tpu.memory_space<vmem>>, %arg4: memref<1x1x8x128xf32, #tpu.memory_space<vmem>>, %arg5: memref<1x1x8x128xf32, #tpu.memory_space<vmem>>, %arg6: memref<1x1x8x128xf32, #tpu.memory_space<vmem>>, %arg7: memref<1x1x8x128xf32, #tpu.memory_space<vmem>>) attributes {dimension_semantics = [#tpu.dimension_semantics<parallel>, #tpu.dimension_semantics<parallel>, #tpu.dimension_semantics<arbitrary>], iteration_bounds = array<i64: 2, 1, 1>, scalar_prefetch = 0 : i64, scratch_operands = 0 : i64, tpu.core_type = #tpu.core_type<tc>, window_params = [{transform_indices = @transform_0, window_bounds = array<i64: 1, 4, 8, 128>}, {transform_indices = @transform_1, window_bounds = array<i64: 1, 1, 8, 128>}, {transform_indices = @transform_2, window_bounds = array<i64: 1, 1, 8, 128>}, {transform_indices = @transform_3, window_bounds = array<i64: 1, 1, 8, 128>}, {transform_indices = @transform_4, window_bounds = array<i64: 1, 1, 8, 128>}]} {
    %c1_i32 = arith.constant 1 : i32
    %0 = arith.muli %arg1, %c1_i32 : i32
    %1 = arith.addi %0, %arg2 : i32
    %c0_i32 = arith.constant 0 : i32
    %2 = arith.cmpi eq, %arg2, %c0_i32 : i32
    %3 = arith.extui %2 : i1 to i32
    %c0_i32_0 = arith.constant 0 : i32
    %4 = arith.cmpi ne, %3, %c0_i32_0 : i32
    scf.if %4 {
      %cst = arith.constant 0.000000e+00 : f32
      %11 = vector.broadcast %cst : f32 to vector<1x1x8x128xf32>
      %c0 = arith.constant 0 : index
      %c0_5 = arith.constant 0 : index
      %c0_6 = arith.constant 0 : index
      %c0_7 = arith.constant 0 : index
      %12 = vector.load %arg5[%c0, %c0_5, %c0_6, %c0_7] : memref<1x1x8x128xf32, #tpu.memory_space<vmem>>, vector<1x1x8x128xf32>
      tpu.vector_store %arg5[%c0, %c0_5, %c0_6, %c0_7], %11 {strides = array<i32>} : memref<1x1x8x128xf32, #tpu.memory_space<vmem>>, vector<1x1x8x128xf32>,
      %cst_8 = arith.constant 0.000000e+00 : f32
      %13 = vector.broadcast %cst_8 : f32 to vector<1x1x8x128xf32>
      %c0_9 = arith.constant 0 : index
      %c0_10 = arith.constant 0 : index
      %c0_11 = arith.constant 0 : index
      %c0_12 = arith.constant 0 : index
      %14 = vector.load %arg6[%c0_9, %c0_10, %c0_11, %c0_12] : memref<1x1x8x128xf32, #tpu.memory_space<vmem>>, vector<1x1x8x128xf32>
      tpu.vector_store %arg6[%c0_9, %c0_10, %c0_11, %c0_12], %13 {strides = array<i32>} : memref<1x1x8x128xf32, #tpu.memory_space<vmem>>, vector<1x1x8x128xf32>,
      %cst_13 = arith.constant 0.000000e+00 : f32
      %15 = vector.broadcast %cst_13 : f32 to vector<1x1x8x128xf32>
      %c0_14 = arith.constant 0 : index
      %c0_15 = arith.constant 0 : index
      %c0_16 = arith.constant 0 : index
      %c0_17 = arith.constant 0 : index
      %16 = vector.load %arg7[%c0_14, %c0_15, %c0_16, %c0_17] : memref<1x1x8x128xf32, #tpu.memory_space<vmem>>, vector<1x1x8x128xf32>
      tpu.vector_store %arg7[%c0_14, %c0_15, %c0_16, %c0_17], %15 {strides = array<i32>} : memref<1x1x8x128xf32, #tpu.memory_space<vmem>>, vector<1x1x8x128xf32>,
    } else {
    }
    %c0_i32_1 = arith.constant 0 : i32
    %5 = arith.cmpi slt, %1, %c0_i32_1 : i32
    %6 = arith.extui %5 : i1 to i32
    %c0_i32_2 = arith.constant 0 : i32
    %7 = arith.cmpi ne, %6, %c0_i32_2 : i32
    scf.if %7 {
      %cst = arith.constant 0.000000e+00 : f32
      %11 = vector.broadcast %cst : f32 to vector<8x128xf32>
      %c0_i32_5 = arith.constant 0 : i32
      %c8_i32 = arith.constant 8 : i32
      %12 = arith.muli %c0_i32_5, %c8_i32 : i32
      %13 = tpu.assume_multiple %12, 8 : i32
      %c0 = arith.constant 0 : index
      %c0_6 = arith.constant 0 : index
      %14 = arith.index_cast %13 : i32 to index
      %c0_7 = arith.constant 0 : index
      %15 = vector.load %arg3[%c0, %c0_6, %14, %c0_7] : memref<1x4x8x128xf32, #tpu.memory_space<vmem>>, vector<1x4x8x128xf32>
      %16 = vector.shape_cast %15 : vector<1x4x8x128xf32> to vector<4x8x128xf32>
      %17 = vector.extract_strided_slice %16 {offsets = [1, 0, 0], sizes = [3, 8, 128], strides = [1, 1, 1]} : vector<4x8x128xf32> to vector<3x8x128xf32>
      %cst_8 = arith.constant dense<0xFF800000> : vector<8x128xf32>
      %18 = vector.multi_reduction <maximumf>, %17, %cst_8 [0] : vector<3x8x128xf32> to vector<8x128xf32>
      %19 = vector.shape_cast %18 : vector<8x128xf32> to vector<1x8x128xf32>
      %20 = vector.broadcast %19 : vector<1x8x128xf32> to vector<4x8x128xf32>
      %21 = arith.subf %16, %20 : vector<4x8x128xf32>
      %22 = math.exp %21 : vector<4x8x128xf32>
      %cst_9 = arith.constant dense<0.000000e+00> : vector<8x128xf32>
      %23 = vector.multi_reduction <add>, %22, %cst_9 [0] : vector<4x8x128xf32> to vector<8x128xf32>
      %cst_10 = arith.constant 1.000000e+00 : f32
      %24 = vector.broadcast %cst_10 : f32 to vector<8x128xf32>
      %25 = arith.divf %24, %23 : vector<8x128xf32>
      %c0_11 = arith.constant 0 : index
      %c0_12 = arith.constant 0 : index
      %26 = arith.index_cast %13 : i32 to index
      %c0_13 = arith.constant 0 : index
      %27 = vector.load %arg4[%c0_11, %c0_12, %26, %c0_13] : memref<1x1x8x128xf32, #tpu.memory_space<vmem>>, vector<1x1x8x128xf32>
      %28 = vector.shape_cast %27 : vector<1x1x8x128xf32> to vector<8x128xf32>
      %cst_14 = arith.constant 1.000000e+00 : f32
      %29 = vector.broadcast %cst_14 : f32 to vector<8x128xf32>
      %30 = arith.subf %29, %28 : vector<8x128xf32>
      %31 = arith.mulf %30, %25 : vector<8x128xf32>
      %32 = vector.shape_cast %31 : vector<8x128xf32> to vector<1x8x128xf32>
      %cst_15 = arith.constant dense<0.000000e+00> : vector<8x128xf32>
      %33 = vector.multi_reduction <add>, %32, %cst_15 [0] : vector<1x8x128xf32> to vector<8x128xf32>
      %34 = arith.addf %11, %33 : vector<8x128xf32>
      %35 = vector.shape_cast %30 : vector<8x128xf32> to vector<1x8x128xf32>
      %cst_16 = arith.constant dense<0.000000e+00> : vector<8x128xf32>
      %36 = vector.multi_reduction <add>, %35, %cst_16 [0] : vector<1x8x128xf32> to vector<8x128xf32>
      %37 = arith.addf %11, %36 : vector<8x128xf32>
      %38 = vector.shape_cast %25 : vector<8x128xf32> to vector<1x8x128xf32>
      %cst_17 = arith.constant dense<0.000000e+00> : vector<8x128xf32>
      %39 = vector.multi_reduction <add>, %38, %cst_17 [0] : vector<1x8x128xf32> to vector<8x128xf32>
      %40 = arith.addf %11, %39 : vector<8x128xf32>
      %c1_i32_18 = arith.constant 1 : i32
      %c0_19 = arith.constant 0 : index
      %c0_20 = arith.constant 0 : index
      %c0_21 = arith.constant 0 : index
      %c0_22 = arith.constant 0 : index
      %41 = vector.load %arg5[%c0_19, %c0_20, %c0_21, %c0_22] : memref<1x1x8x128xf32, #tpu.memory_space<vmem>>, vector<1x1x8x128xf32>
      %42 = vector.shape_cast %41 : vector<1x1x8x128xf32> to vector<8x128xf32>
      %43 = arith.addf %42, %34 : vector<8x128xf32>
      %c0_23 = arith.constant 0 : index
      %c0_24 = arith.constant 0 : index
      %c0_25 = arith.constant 0 : index
      %c0_26 = arith.constant 0 : index
      %44 = vector.load %arg5[%c0_23, %c0_24, %c0_25, %c0_26] : memref<1x1x8x128xf32, #tpu.memory_space<vmem>>, vector<1x1x8x128xf32>
      %45 = vector.shape_cast %44 : vector<1x1x8x128xf32> to vector<8x128xf32>
      %46 = vector.shape_cast %43 : vector<8x128xf32> to vector<1x1x8x128xf32>
      tpu.vector_store %arg5[%c0_23, %c0_24, %c0_25, %c0_26], %46 {strides = array<i32>} : memref<1x1x8x128xf32, #tpu.memory_space<vmem>>, vector<1x1x8x128xf32>,
      %c0_27 = arith.constant 0 : index
      %c0_28 = arith.constant 0 : index
      %c0_29 = arith.constant 0 : index
      %c0_30 = arith.constant 0 : index
      %47 = vector.load %arg6[%c0_27, %c0_28, %c0_29, %c0_30] : memref<1x1x8x128xf32, #tpu.memory_space<vmem>>, vector<1x1x8x128xf32>
      %48 = vector.shape_cast %47 : vector<1x1x8x128xf32> to vector<8x128xf32>
      %49 = arith.addf %48, %37 : vector<8x128xf32>
      %c0_31 = arith.constant 0 : index
      %c0_32 = arith.constant 0 : index
      %c0_33 = arith.constant 0 : index
      %c0_34 = arith.constant 0 : index
      %50 = vector.load %arg6[%c0_31, %c0_32, %c0_33, %c0_34] : memref<1x1x8x128xf32, #tpu.memory_space<vmem>>, vector<1x1x8x128xf32>
      %51 = vector.shape_cast %50 : vector<1x1x8x128xf32> to vector<8x128xf32>
      %52 = vector.shape_cast %49 : vector<8x128xf32> to vector<1x1x8x128xf32>
      tpu.vector_store %arg6[%c0_31, %c0_32, %c0_33, %c0_34], %52 {strides = array<i32>} : memref<1x1x8x128xf32, #tpu.memory_space<vmem>>, vector<1x1x8x128xf32>,
      %c0_35 = arith.constant 0 : index
      %c0_36 = arith.constant 0 : index
      %c0_37 = arith.constant 0 : index
      %c0_38 = arith.constant 0 : index
      %53 = vector.load %arg7[%c0_35, %c0_36, %c0_37, %c0_38] : memref<1x1x8x128xf32, #tpu.memory_space<vmem>>, vector<1x1x8x128xf32>
      %54 = vector.shape_cast %53 : vector<1x1x8x128xf32> to vector<8x128xf32>
      %55 = arith.addf %54, %40 : vector<8x128xf32>
      %c0_39 = arith.constant 0 : index
      %c0_40 = arith.constant 0 : index
      %c0_41 = arith.constant 0 : index
      %c0_42 = arith.constant 0 : index
      %56 = vector.load %arg7[%c0_39, %c0_40, %c0_41, %c0_42] : memref<1x1x8x128xf32, #tpu.memory_space<vmem>>, vector<1x1x8x128xf32>
      %57 = vector.shape_cast %56 : vector<1x1x8x128xf32> to vector<8x128xf32>
      %58 = vector.shape_cast %55 : vector<8x128xf32> to vector<1x1x8x128xf32>
      tpu.vector_store %arg7[%c0_39, %c0_40, %c0_41, %c0_42], %58 {strides = array<i32>} : memref<1x1x8x128xf32, #tpu.memory_space<vmem>>, vector<1x1x8x128xf32>,
    } else {
    }
    %c0_i32_3 = arith.constant 0 : i32
    %8 = arith.cmpi sge, %1, %c0_i32_3 : i32
    %9 = arith.extui %8 : i1 to i32
    %c0_i32_4 = arith.constant 0 : i32
    %10 = arith.cmpi ne, %9, %c0_i32_4 : i32
    scf.if %10 {
      %cst = arith.constant 0.000000e+00 : f32
      %11 = vector.broadcast %cst : f32 to vector<8x128xf32>
      %c0_i32_5 = arith.constant 0 : i32
      %c8_i32 = arith.constant 8 : i32
      %12 = arith.muli %c0_i32_5, %c8_i32 : i32
      %13 = tpu.assume_multiple %12, 8 : i32
      %c0 = arith.constant 0 : index
      %c0_6 = arith.constant 0 : index
      %14 = arith.index_cast %13 : i32 to index
      %c0_7 = arith.constant 0 : index
      %15 = vector.load %arg3[%c0, %c0_6, %14, %c0_7] : memref<1x4x8x128xf32, #tpu.memory_space<vmem>>, vector<1x4x8x128xf32>
      %16 = vector.shape_cast %15 : vector<1x4x8x128xf32> to vector<4x8x128xf32>
      %17 = vector.extract_strided_slice %16 {offsets = [1, 0, 0], sizes = [3, 8, 128], strides = [1, 1, 1]} : vector<4x8x128xf32> to vector<3x8x128xf32>
      %cst_8 = arith.constant dense<0xFF800000> : vector<8x128xf32>
      %18 = vector.multi_reduction <maximumf>, %17, %cst_8 [0] : vector<3x8x128xf32> to vector<8x128xf32>
      %19 = vector.shape_cast %18 : vector<8x128xf32> to vector<1x8x128xf32>
      %20 = vector.broadcast %19 : vector<1x8x128xf32> to vector<4x8x128xf32>
      %21 = arith.subf %16, %20 : vector<4x8x128xf32>
      %22 = math.exp %21 : vector<4x8x128xf32>
      %cst_9 = arith.constant dense<0.000000e+00> : vector<8x128xf32>
      %23 = vector.multi_reduction <add>, %22, %cst_9 [0] : vector<4x8x128xf32> to vector<8x128xf32>
      %cst_10 = arith.constant 1.000000e+00 : f32
      %24 = vector.broadcast %cst_10 : f32 to vector<8x128xf32>
      %25 = arith.divf %24, %23 : vector<8x128xf32>
      %c0_11 = arith.constant 0 : index
      %c0_12 = arith.constant 0 : index
      %26 = arith.index_cast %13 : i32 to index
      %c0_13 = arith.constant 0 : index
      %27 = vector.load %arg4[%c0_11, %c0_12, %26, %c0_13] : memref<1x1x8x128xf32, #tpu.memory_space<vmem>>, vector<1x1x8x128xf32>
      %28 = vector.shape_cast %27 : vector<1x1x8x128xf32> to vector<8x128xf32>
      %cst_14 = arith.constant 1.000000e+00 : f32
      %29 = vector.broadcast %cst_14 : f32 to vector<8x128xf32>
      %30 = arith.subf %29, %28 : vector<8x128xf32>
      %31 = tpu.iota {dimensions = array<i32: 0>} : vector<8x128xi32>
      %32 = tpu.iota {dimensions = array<i32: 1>} : vector<8x128xi32>
      %c8_i32_15 = arith.constant 8 : i32
      %33 = arith.muli %1, %c8_i32_15 : i32
      %34 = arith.addi %33, %13 : i32
      %35 = vector.broadcast %34 : i32 to vector<8x128xi32>
      %36 = arith.addi %35, %31 : vector<8x128xi32>
      %c128_i32 = arith.constant 128 : i32
      %37 = vector.broadcast %c128_i32 : i32 to vector<8x128xi32>
      %38 = arith.muli %36, %37 : vector<8x128xi32>
      %39 = arith.addi %38, %32 : vector<8x128xi32>
      %c256_i32 = arith.constant 256 : i32
      %40 = vector.broadcast %c256_i32 : i32 to vector<8x128xi32>
      %41 = arith.cmpi slt, %39, %40 : vector<8x128xi32>
      %cst_16 = arith.constant 0.000000e+00 : f32
      %42 = vector.broadcast %cst_16 : f32 to vector<8x128xf32>
      %43 = arith.select %41, %25, %42 : vector<8x128xi1>, vector<8x128xf32>
      %cst_17 = arith.constant 0.000000e+00 : f32
      %44 = vector.broadcast %cst_17 : f32 to vector<8x128xf32>
      %45 = arith.select %41, %30, %44 : vector<8x128xi1>, vector<8x128xf32>
      %46 = arith.mulf %45, %43 : vector<8x128xf32>
      %47 = vector.shape_cast %46 : vector<8x128xf32> to vector<1x8x128xf32>
      %cst_18 = arith.constant dense<0.000000e+00> : vector<8x128xf32>
      %48 = vector.multi_reduction <add>, %47, %cst_18 [0] : vector<1x8x128xf32> to vector<8x128xf32>
      %49 = arith.addf %11, %48 : vector<8x128xf32>
      %50 = vector.shape_cast %45 : vector<8x128xf32> to vector<1x8x128xf32>
      %cst_19 = arith.constant dense<0.000000e+00> : vector<8x128xf32>
      %51 = vector.multi_reduction <add>, %50, %cst_19 [0] : vector<1x8x128xf32> to vector<8x128xf32>
      %52 = arith.addf %11, %51 : vector<8x128xf32>
      %53 = vector.shape_cast %43 : vector<8x128xf32> to vector<1x8x128xf32>
      %cst_20 = arith.constant dense<0.000000e+00> : vector<8x128xf32>
      %54 = vector.multi_reduction <add>, %53, %cst_20 [0] : vector<1x8x128xf32> to vector<8x128xf32>
      %55 = arith.addf %11, %54 : vector<8x128xf32>
      %c1_i32_21 = arith.constant 1 : i32
      %c0_22 = arith.constant 0 : index
      %c0_23 = arith.constant 0 : index
      %c0_24 = arith.constant 0 : index
      %c0_25 = arith.constant 0 : index
      %56 = vector.load %arg5[%c0_22, %c0_23, %c0_24, %c0_25] : memref<1x1x8x128xf32, #tpu.memory_space<vmem>>, vector<1x1x8x128xf32>
      %57 = vector.shape_cast %56 : vector<1x1x8x128xf32> to vector<8x128xf32>
      %58 = arith.addf %57, %49 : vector<8x128xf32>
      %c0_26 = arith.constant 0 : index
      %c0_27 = arith.constant 0 : index
      %c0_28 = arith.constant 0 : index
      %c0_29 = arith.constant 0 : index
      %59 = vector.load %arg5[%c0_26, %c0_27, %c0_28, %c0_29] : memref<1x1x8x128xf32, #tpu.memory_space<vmem>>, vector<1x1x8x128xf32>
      %60 = vector.shape_cast %59 : vector<1x1x8x128xf32> to vector<8x128xf32>
      %61 = vector.shape_cast %58 : vector<8x128xf32> to vector<1x1x8x128xf32>
      tpu.vector_store %arg5[%c0_26, %c0_27, %c0_28, %c0_29], %61 {strides = array<i32>} : memref<1x1x8x128xf32, #tpu.memory_space<vmem>>, vector<1x1x8x128xf32>,
      %c0_30 = arith.constant 0 : index
      %c0_31 = arith.constant 0 : index
      %c0_32 = arith.constant 0 : index
      %c0_33 = arith.constant 0 : index
      %62 = vector.load %arg6[%c0_30, %c0_31, %c0_32, %c0_33] : memref<1x1x8x128xf32, #tpu.memory_space<vmem>>, vector<1x1x8x128xf32>
      %63 = vector.shape_cast %62 : vector<1x1x8x128xf32> to vector<8x128xf32>
      %64 = arith.addf %63, %52 : vector<8x128xf32>
      %c0_34 = arith.constant 0 : index
      %c0_35 = arith.constant 0 : index
      %c0_36 = arith.constant 0 : index
      %c0_37 = arith.constant 0 : index
      %65 = vector.load %arg6[%c0_34, %c0_35, %c0_36, %c0_37] : memref<1x1x8x128xf32, #tpu.memory_space<vmem>>, vector<1x1x8x128xf32>
      %66 = vector.shape_cast %65 : vector<1x1x8x128xf32> to vector<8x128xf32>
      %67 = vector.shape_cast %64 : vector<8x128xf32> to vector<1x1x8x128xf32>
      tpu.vector_store %arg6[%c0_34, %c0_35, %c0_36, %c0_37], %67 {strides = array<i32>} : memref<1x1x8x128xf32, #tpu.memory_space<vmem>>, vector<1x1x8x128xf32>,
      %c0_38 = arith.constant 0 : index
      %c0_39 = arith.constant 0 : index
      %c0_40 = arith.constant 0 : index
      %c0_41 = arith.constant 0 : index
      %68 = vector.load %arg7[%c0_38, %c0_39, %c0_40, %c0_41] : memref<1x1x8x128xf32, #tpu.memory_space<vmem>>, vector<1x1x8x128xf32>
      %69 = vector.shape_cast %68 : vector<1x1x8x128xf32> to vector<8x128xf32>
      %70 = arith.addf %69, %55 : vector<8x128xf32>
      %c0_42 = arith.constant 0 : index
      %c0_43 = arith.constant 0 : index
      %c0_44 = arith.constant 0 : index
      %c0_45 = arith.constant 0 : index
      %71 = vector.load %arg7[%c0_42, %c0_43, %c0_44, %c0_45] : memref<1x1x8x128xf32, #tpu.memory_space<vmem>>, vector<1x1x8x128xf32>
      %72 = vector.shape_cast %71 : vector<1x1x8x128xf32> to vector<8x128xf32>
      %73 = vector.shape_cast %70 : vector<8x128xf32> to vector<1x1x8x128xf32>
      tpu.vector_store %arg7[%c0_42, %c0_43, %c0_44, %c0_45], %73 {strides = array<i32>} : memref<1x1x8x128xf32, #tpu.memory_space<vmem>>, vector<1x1x8x128xf32>,
    } else {
    }
    return
  }
  func.func @transform_0(%arg0: i32, %arg1: i32, %arg2: i32) -> (i32, i32, i32, i32) {
    %c1_i32 = arith.constant 1 : i32
    %0 = arith.muli %arg1, %c1_i32 : i32
    %1 = arith.addi %0, %arg2 : i32
    %c0_i32 = arith.constant 0 : i32
    %2 = arith.minsi %1, %c0_i32 : i32
    %c0_i32_0 = arith.constant 0 : i32
    %c0_i32_1 = arith.constant 0 : i32
    %c0_i32_2 = arith.constant 0 : i32
    return %arg0, %c0_i32_0, %2, %c0_i32_1 : i32, i32, i32, i32
  }
  func.func @transform_1(%arg0: i32, %arg1: i32, %arg2: i32) -> (i32, i32, i32, i32) {
    %c1_i32 = arith.constant 1 : i32
    %0 = arith.muli %arg1, %c1_i32 : i32
    %1 = arith.addi %0, %arg2 : i32
    %c0_i32 = arith.constant 0 : i32
    %2 = arith.minsi %1, %c0_i32 : i32
    %c0_i32_0 = arith.constant 0 : i32
    %c0_i32_1 = arith.constant 0 : i32
    %c0_i32_2 = arith.constant 0 : i32
    return %arg0, %c0_i32_0, %2, %c0_i32_1 : i32, i32, i32, i32
  }
  func.func @transform_2(%arg0: i32, %arg1: i32, %arg2: i32) -> (i32, i32, i32, i32) {
    %c0_i32 = arith.constant 0 : i32
    %c0_i32_0 = arith.constant 0 : i32
    %c0_i32_1 = arith.constant 0 : i32
    return %arg0, %arg1, %c0_i32, %c0_i32_0 : i32, i32, i32, i32
  }
  func.func @transform_3(%arg0: i32, %arg1: i32, %arg2: i32) -> (i32, i32, i32, i32) {
    %c0_i32 = arith.constant 0 : i32
    %c0_i32_0 = arith.constant 0 : i32
    %c0_i32_1 = arith.constant 0 : i32
    return %arg0, %arg1, %c0_i32, %c0_i32_0 : i32, i32, i32, i32
  }
  func.func @transform_4(%arg0: i32, %arg1: i32, %arg2: i32) -> (i32, i32, i32, i32) {
    %c0_i32 = arith.constant 0 : i32
    %c0_i32_0 = arith.constant 0 : i32
    %c0_i32_1 = arith.constant 0 : i32
    return %arg0, %arg1, %c0_i32, %c0_i32_0 : i32, i32, i32, i32
  }
}

</mosaic_0001>

<llo_original>
// kernel: tpu_custom_call.1
$region0: #{tpu_custom_call.1}
  #allocation0 [shape = 'u32[]', space=smem, size = 0x4, offset = 0x4, fixed_abs, tag = 'smem constant byte address 0x4 - core index']
  #allocation1 [shape = 'u32[144,128]{1,0:T(1,128)}', space=vmem, size = 0x12000, scoped, tag = 'internal scratch']
  %s0 = inlined_call_operand.hbm [shape: f32[2,4,8,128], index: 0, kind: input, shape index: {}]
  %s1 = inlined_call_operand.hbm [shape: f32[2,4,8,128], index: 1, kind: input, shape index: {}]
  %s2 = inlined_call_operand.hbm [shape: f32[2,1,8,128], index: 2, kind: output, shape index: {0}]
  %s3 = inlined_call_operand.hbm [shape: f32[2,1,8,128], index: 3, kind: output, shape index: {1}]
  %s4 = inlined_call_operand.hbm [shape: f32[2,1,8,128], index: 4, kind: output, shape index: {2}]
  %5 = xla_tuple %s2, %s3, %s4
  %s6 = sld [smem:[#allocation0]]
  $region77: #{tpu_custom_call.1} parent=0
    _
  %s8 = ssub.s32 1, %s6
  %s9 = scalar_select 0, %s8, %s6
  $region1: #{tpu_custom_call.1} parent=0
    #allocation2 [shape = 'u8[32768]{0}', space=vmem, size = 0x8000, scoped, tag = 'input window, operand 0']
    #allocation3 [shape = 's32[2]{0}', space=sflag, size = 0x8, scoped, tag = 'scoped memory for tpu_custom_call.1']
    #allocation4 [shape = 's32[2]{0}', space=sflag, size = 0x8, scoped, tag = 'scoped memory for tpu_custom_call.1']
    #allocation5 [shape = 'u8[8192]{0}', space=vmem, size = 0x2000, scoped, tag = 'input window, operand 1']
    #allocation6 [shape = 's32[2]{0}', space=sflag, size = 0x8, scoped, tag = 'scoped memory for tpu_custom_call.1']
    #allocation7 [shape = 'u8[8192]{0}', space=vmem, size = 0x2000, scoped, tag = 'output window, operand 0']
    #allocation8 [shape = 'u8[8192]{0}', space=vmem, size = 0x2000, scoped, tag = 'output window, operand 1']
    #allocation9 [shape = 's32[2]{0}', space=sflag, size = 0x8, scoped, tag = 'scoped memory for tpu_custom_call.1']
    #allocation10 [shape = 'u8[8192]{0}', space=vmem, size = 0x2000, scoped, tag = 'output window, operand 2']
    %10 = vsyncpa [#allocation3], 0
    %s11 = scalar_lea.sflag [#allocation3], 1
    %12 = vsyncpa %s11, 0
    %13 = vsyncpa [#allocation6], 0
    %s14 = scalar_lea.sflag [#allocation6], 1
    %15 = vsyncpa %s14, 0
    %16 = vsyncpa [#allocation4], 0
    %s17 = scalar_lea.sflag [#allocation4], 1
    %18 = vsyncpa %s17, 0
    %19 = vsyncpa [#allocation9], 0
    %s20 = scalar_lea.sflag [#allocation9], 1
    %21 = vsyncpa %s20, 0
    loop: start=0, step=1, limit=4
    $region2: #{tpu_custom_call.1} parent=1 // loop_pre_header
      _
    $region3: #{tpu_custom_call.1} parent=1 // loop_header
      %s23 = sphi 0, %s27
      %p24 = scmp.ge.s32.totalorder %s23, 4
      %s30 = sphi 0, %s49
      %s31 = sphi 0, %s45
      %s32 = sphi 0, %s41
      %s33 = sphi 0, %s30
      %s34 = sphi 0, %s31
      %s35 = sphi 0, %s32
      %s36 = sphi 0, %s33
      %s37 = sphi 0, %s34
      %s38 = sphi 0, %s35
      %s60 = sphi 0, %s62
      %s63 = sphi 0, %s60
      %s64 = sphi 0, %s63
      %s80 = sphi 0, %s64
      %s94 = sphi 0, %s96
      %s97 = sphi 0, %s94
      %s98 = sphi 0, %s97
      %s114 = sphi 0, %s98
      %s122 = sphi 0, %s124
      %s125 = sphi 0, %s122
      %s126 = sphi 0, %s125
      %s142 = sphi 0, %s126
      %s150 = sphi 0, %s152
      %s153 = sphi 0, %s150
      %s154 = sphi 0, %s153
      %s170 = sphi 0, %s154
      %s178 = sphi 0, %s180
      %s181 = sphi 0, %s178
      %s182 = sphi 0, %s181
      %s198 = sphi 0, %s182
    $region4: #{tpu_custom_call.1} parent=1 // loop_header_branch
      %26 = sbr.rel (%p24) target = $region8
    $region5: #{tpu_custom_call.1} parent=1 // loop_body
      %s28 = ssub.s32 %s23, 1
      %s29 = ssub.s32 %s23, 2
      %s39 = sadd.s32 1, %s32
      %p40 = scmp.ge.s32.totalorder %s39, 1
      %s41 = scalar_select %p40, 0, %s39
      %s42 = sadd.s32 1, %s31
      %s43 = scalar_select %p40, %s42, %s31
      %p44 = scmp.ge.s32.totalorder %s43, 1
      %s45 = scalar_select %p44, 0, %s43
      %s46 = sadd.s32 1, %s30
      %s47 = scalar_select %p44, %s46, %s30
      %p48 = scmp.ge.s32.totalorder %s47, 2
      %s49 = scalar_select %p48, 0, %s47
      %s50 = sadd.s32 %s31, %s32
      %p51 = scmp.lt.s32.totalorder %s50, 0
      %s52 = scalar_select %p51, %s50, 0
      %s53 = sadd.s32 %s45, %s41
      %p54 = scmp.lt.s32.totalorder %s53, 0
      %s55 = scalar_select %p54, %s53, 0
      %s56 = ssub.s32 %s30, %s49
      %s57 = ssub.s32 %s52, %s55
      %s58 = sor.u32 %s56, %s57
      %p59 = scmp.eq.s32.totalorder %s58, 0
      %s61 = sadd.s32 %s60, 1
      %s62 = scalar_select %p59, %s60, %s61
      %p65 = pneg %p59
      %p66 = scmp.eq.s32.totalorder %s23, 1
      %p67 = por %p65, %p66
      %p68 = scmp.ne.s32.totalorder %s60, %s63
      %p69 = scmp.eq.s32.totalorder %s23, 0
      %p70 = por %p68, %p69
      %p71 = scmp.ne.s32.totalorder %s60, %s63
      %p72 = scmp.eq.s32.totalorder %s28, 1
      %p73 = por %p71, %p72
      %p74 = scmp.ne.s32.totalorder %s63, %s64
      %p75 = scmp.eq.s32.totalorder %s28, 0
      %p76 = por %p74, %p75
      %p77 = scmp.ne.s32.totalorder %s63, %s64
      %p78 = scmp.eq.s32.totalorder %s29, 1
      %p79 = por %p77, %p78
      %p81 = scmp.ne.s32.totalorder %s64, %s80
      %p82 = scmp.eq.s32.totalorder %s29, 0
      %p83 = por %p81, %p82
      %s84 = sadd.s32 %s31, %s32
      %p85 = scmp.lt.s32.totalorder %s84, 0
      %s86 = scalar_select %p85, %s84, 0
      %s87 = sadd.s32 %s45, %s41
      %p88 = scmp.lt.s32.totalorder %s87, 0
      %s89 = scalar_select %p88, %s87, 0
      %s90 = ssub.s32 %s30, %s49
      %s91 = ssub.s32 %s86, %s89
      %s92 = sor.u32 %s90, %s91
      %p93 = scmp.eq.s32.totalorder %s92, 0
      %s95 = sadd.s32 %s94, 1
      %s96 = scalar_select %p93, %s94, %s95
      %p99 = pneg %p93
      %p100 = scmp.eq.s32.totalorder %s23, 1
      %p101 = por %p99, %p100
      %p102 = scmp.ne.s32.totalorder %s94, %s97
      %p103 = scmp.eq.s32.totalorder %s23, 0
      %p104 = por %p102, %p103
      %p105 = scmp.ne.s32.totalorder %s94, %s97
      %p106 = scmp.eq.s32.totalorder %s28, 1
      %p107 = por %p105, %p106
      %p108 = scmp.ne.s32.totalorder %s97, %s98
      %p109 = scmp.eq.s32.totalorder %s28, 0
      %p110 = por %p108, %p109
      %p111 = scmp.ne.s32.totalorder %s97, %s98
      %p112 = scmp.eq.s32.totalorder %s29, 1
      %p113 = por %p111, %p112
      %p115 = scmp.ne.s32.totalorder %s98, %s114
      %p116 = scmp.eq.s32.totalorder %s29, 0
      %p117 = por %p115, %p116
      %s118 = ssub.s32 %s30, %s49
      %s119 = ssub.s32 %s31, %s45
      %s120 = sor.u32 %s118, %s119
      %p121 = scmp.eq.s32.totalorder %s120, 0
      %s123 = sadd.s32 %s122, 1
      %s124 = scalar_select %p121, %s122, %s123
      %p127 = pneg %p121
      %p128 = scmp.eq.s32.totalorder %s23, 1
      %p129 = por %p127, %p128
      %p130 = scmp.ne.s32.totalorder %s122, %s125
      %p131 = scmp.eq.s32.totalorder %s23, 0
      %p132 = por %p130, %p131
      %p133 = scmp.ne.s32.totalorder %s122, %s125
      %p134 = scmp.eq.s32.totalorder %s28, 1
      %p135 = por %p133, %p134
      %p136 = scmp.ne.s32.totalorder %s125, %s126
      %p137 = scmp.eq.s32.totalorder %s28, 0
      %p138 = por %p136, %p137
      %p139 = scmp.ne.s32.totalorder %s125, %s126
      %p140 = scmp.eq.s32.totalorder %s29, 1
      %p141 = por %p139, %p140
      %p143 = scmp.ne.s32.totalorder %s126, %s142
      %p144 = scmp.eq.s32.totalorder %s29, 0
      %p145 = por %p143, %p144
      %s146 = ssub.s32 %s30, %s49
      %s147 = ssub.s32 %s31, %s45
      %s148 = sor.u32 %s146, %s147
      %p149 = scmp.eq.s32.totalorder %s148, 0
      %s151 = sadd.s32 %s150, 1
      %s152 = scalar_select %p149, %s150, %s151
      %p155 = pneg %p149
      %p156 = scmp.eq.s32.totalorder %s23, 1
      %p157 = por %p155, %p156
      %p158 = scmp.ne.s32.totalorder %s150, %s153
      %p159 = scmp.eq.s32.totalorder %s23, 0
      %p160 = por %p158, %p159
      %p161 = scmp.ne.s32.totalorder %s150, %s153
      %p162 = scmp.eq.s32.totalorder %s28, 1
      %p163 = por %p161, %p162
      %p164 = scmp.ne.s32.totalorder %s153, %s154
      %p165 = scmp.eq.s32.totalorder %s28, 0
      %p166 = por %p164, %p165
      %p167 = scmp.ne.s32.totalorder %s153, %s154
      %p168 = scmp.eq.s32.totalorder %s29, 1
      %p169 = por %p167, %p168
      %p171 = scmp.ne.s32.totalorder %s154, %s170
      %p172 = scmp.eq.s32.totalorder %s29, 0
      %p173 = por %p171, %p172
      %s174 = ssub.s32 %s30, %s49
      %s175 = ssub.s32 %s31, %s45
      %s176 = sor.u32 %s174, %s175
      %p177 = scmp.eq.s32.totalorder %s176, 0
      %s179 = sadd.s32 %s178, 1
      %s180 = scalar_select %p177, %s178, %s179
      %p183 = pneg %p177
      %p184 = scmp.eq.s32.totalorder %s23, 1
      %p185 = por %p183, %p184
      %p186 = scmp.ne.s32.totalorder %s178, %s181
      %p187 = scmp.eq.s32.totalorder %s23, 0
      %p188 = por %p186, %p187
      %p189 = scmp.ne.s32.totalorder %s178, %s181
      %p190 = scmp.eq.s32.totalorder %s28, 1
      %p191 = por %p189, %p190
      %p192 = scmp.ne.s32.totalorder %s181, %s182
      %p193 = scmp.eq.s32.totalorder %s28, 0
      %p194 = por %p192, %p193
      %p195 = scmp.ne.s32.totalorder %s181, %s182
      %p196 = scmp.eq.s32.totalorder %s29, 1
      %p197 = por %p195, %p196
      %p199 = scmp.ne.s32.totalorder %s182, %s198
      %p200 = scmp.eq.s32.totalorder %s29, 0
      %p201 = por %p199, %p200
      %p202 = scmp.le.s32.totalorder 1, %s23
      %p203 = scmp.lt.s32.totalorder %s23, 3
      %p204 = pnand %p202, %p203
      %p205 = pneg %p204
      // Predicated region
      $region9: #{tpu_custom_call.1} parent=5 // pred_check
        _
      $region10: #{tpu_custom_call.1} parent=5 // pred_check_branch
        %207 = sbr.rel (%p204) target = $region12
      $region11: #{tpu_custom_call.1} parent=5 // pred_region
        %s208 = ssub.s32 %s23, 1
      $region12: #{tpu_custom_call.1} parent=5 // pred_fallthru
        _
      %p209 = scmp.lt.s32.totalorder %s23, 2
      // Predicated region
      $region13: #{tpu_custom_call.1} parent=5 // pred_check
        %p210 = pneg %p209
      $region14: #{tpu_custom_call.1} parent=5 // pred_check_branch
        %212 = sbr.rel (%p210) target = $region16
      $region15: #{tpu_custom_call.1} parent=5 // pred_region
        // Predicated region
        $region17: #{tpu_custom_call.1} parent=15 // pred_check
          %p213 = pneg %p70
        $region18: #{tpu_custom_call.1} parent=15 // pred_check_branch
          %215 = sbr.rel (%p213) target = $region20
        $region19: #{tpu_custom_call.1} parent=15 // pred_region
          %s216 = sand.u32 %s60, 1
          %s217 = scalar_lea.sflag [#allocation3], %s216
          %s218 = sand.u32 %s60, 1
          %s219 = smul.addr %s218, 32
          %s220 = scalar_lea.vmem [#allocation2], %s219
          %s221 = sadd.s32 %s31, %s32
          %p222 = scmp.lt.s32.totalorder %s221, 0
          %s223 = scalar_select %p222, %s221, 0
          %s225 = ssub.s32 512, 512
          %226 = vsyncadd %s217, %s225
          %s227 = smul.addr %s30, 4
          %s228 = sadd.s32 %s223, %s227
          %s229 = smul.addr %s228, 128
          %s230 = scalar_lea.hbm %s0, %s229
          %s231 = sshll.u32 %s220, 4
          %s232 = int_to_ptr.vmem [resolvable:$true] %s231
          %237 = dma.hbm_to_vmem [thread:$0]  %s230, 512, %s232, %s217, 128, 128, 8
        $region20: #{tpu_custom_call.1} parent=15 // pred_fallthru
          _
        // Predicated region
        $region21: #{tpu_custom_call.1} parent=15 // pred_check
          %p238 = pneg %p104
        $region22: #{tpu_custom_call.1} parent=15 // pred_check_branch
          %240 = sbr.rel (%p238) target = $region24
        $region23: #{tpu_custom_call.1} parent=15 // pred_region
          %s241 = sand.u32 %s94, 1
          %s242 = scalar_lea.sflag [#allocation6], %s241
          %s243 = sand.u32 %s94, 1
          %s244 = smul.addr %s243, 8
          %s245 = scalar_lea.vmem [#allocation5], %s244
          %s246 = sadd.s32 %s31, %s32
          %p247 = scmp.lt.s32.totalorder %s246, 0
          %s248 = scalar_select %p247, %s246, 0
          %s250 = ssub.s32 128, 128
          %251 = vsyncadd %s242, %s250
          %s252 = smul.addr %s30, 4
          %s253 = sadd.s32 %s248, %s252
          %s254 = smul.addr %s253, 128
          %s255 = scalar_lea.hbm %s1, %s254
          %s257 = sshll.u32 %s245, 4
          %s258 = int_to_ptr.vmem [resolvable:$true] %s257
          %260 = dma.hbm_to_vmem [thread:$0]  %s255, 128, %s258, %s242
        $region24: #{tpu_custom_call.1} parent=15 // pred_fallthru
          _
      $region16: #{tpu_custom_call.1} parent=5 // pred_fallthru
        _
      %p261 = scmp.le.s32.totalorder 1, %s23
      %p262 = scmp.lt.s32.totalorder %s23, 3
      %p263 = pnand %p261, %p262
      %p264 = pneg %p263
      // Predicated region
      $region25: #{tpu_custom_call.1} parent=5 // pred_check
        _
      $region26: #{tpu_custom_call.1} parent=5 // pred_check_branch
        %266 = sbr.rel (%p263) target = $region28
      $region27: #{tpu_custom_call.1} parent=5 // pred_region
        %s267 = ssub.s32 %s23, 1
        %s268 = sand.u32 %s63, 1
        %s269 = scalar_lea.sflag [#allocation3], %s268
        %s270 = sand.u32 %s63, 1
        %s271 = smul.addr %s270, 32
        %s272 = scalar_lea.vmem [#allocation2], %s271
        // Predicated region
        $region29: #{tpu_custom_call.1} parent=27 // pred_check
          %p273 = pneg %p76
        $region30: #{tpu_custom_call.1} parent=27 // pred_check_branch
          %275 = sbr.rel (%p273) target = $region32
        $region31: #{tpu_custom_call.1} parent=27 // pred_region
          %276 = dma.done %s269, 512
        $region32: #{tpu_custom_call.1} parent=27 // pred_fallthru
          _
        %s277 = sand.u32 %s97, 1
        %s278 = scalar_lea.sflag [#allocation6], %s277
        %s279 = sand.u32 %s97, 1
        %s280 = smul.addr %s279, 8
        %s281 = scalar_lea.vmem [#allocation5], %s280
        // Predicated region
        $region33: #{tpu_custom_call.1} parent=27 // pred_check
          %p282 = pneg %p110
        $region34: #{tpu_custom_call.1} parent=27 // pred_check_branch
          %284 = sbr.rel (%p282) target = $region36
        $region35: #{tpu_custom_call.1} parent=27 // pred_region
          %285 = dma.done %s278, 128
        $region36: #{tpu_custom_call.1} parent=27 // pred_fallthru
          _
        %s286 = sand.u32 %s63, 1
        %s287 = scalar_lea.sflag [#allocation3], %s286
        %s288 = sand.u32 %s63, 1
        %s289 = smul.addr %s288, 32
        %s290 = scalar_lea.vmem [#allocation2], %s289
        %p291 = pneg %p76
        %p292 = pneg %p73
        %s293 = sand.u32 %s97, 1
        %s294 = scalar_lea.sflag [#allocation6], %s293
        %s295 = sand.u32 %s97, 1
        %s296 = smul.addr %s295, 8
        %s297 = scalar_lea.vmem [#allocation5], %s296
        %p298 = pneg %p110
        %p299 = pneg %p107
        %p300 = pneg %p138
        %p301 = pneg %p135
        %s302 = sand.u32 %s125, 1
        %s303 = scalar_lea.sflag [#allocation4], %s302
        %s304 = sand.u32 %s125, 1
        %s305 = smul.addr %s304, 8
        %s306 = scalar_lea.vmem [#allocation7], %s305
        %p307 = pneg %p166
        %p308 = pneg %p163
        %s309 = sand.u32 %s28, 1
        %s310 = scalar_lea.sflag [#allocation9], %s309
        %s311 = sand.u32 %s153, 1
        %s312 = smul.addr %s311, 8
        %s313 = scalar_lea.vmem [#allocation8], %s312
        %p314 = pneg %p194
        %p315 = pneg %p191
        %s316 = sand.u32 %s28, 1
        %s317 = scalar_lea.sflag [#allocation9], %s316
        %s318 = sand.u32 %s181, 1
        %s319 = smul.addr %s318, 8
        %s320 = scalar_lea.vmem [#allocation10], %s319
        %s321 = sadd.s32 %s34, %s35
        %p322 = scmp.lt.s32.totalorder %s321, 0
        %s323 = scalar_select %p322, %s321, 0
        %s324 = sadd.s32 %s34, %s35
        %p325 = scmp.lt.s32.totalorder %s324, 0
        %s326 = scalar_select %p325, %s324, 0
        %s327 = sadd.s32 %s34, %s35
        %p328 = scmp.eq.s32.totalorder %s35, 0
        // Predicated region
        $region37: #{tpu_custom_call.1} parent=27 // pred_check
          %p329 = pneg %p328
        $region38: #{tpu_custom_call.1} parent=27 // pred_check_branch
          %331 = sbr.rel (%p329) target = $region40
        $region39: #{tpu_custom_call.1} parent=27 // pred_region
          %332 = vst [vmem:[%s306] sm:$0xff] 0.0
          %333 = vst [vmem:[%s313] sm:$0xff] 0.0
          %334 = vst [vmem:[%s320] sm:$0xff] 0.0
        $region40: #{tpu_custom_call.1} parent=27 // pred_fallthru
          _
        %p335 = scmp.lt.s32.totalorder %s327, 0
        // Predicated region
        $region41: #{tpu_custom_call.1} parent=27 // pred_check
          %p336 = pneg %p335
        $region42: #{tpu_custom_call.1} parent=27 // pred_check_branch
          %338 = sbr.rel (%p336) target = $region44
        $region43: #{tpu_custom_call.1} parent=27 // pred_region
          %v339 = vld [vmem:[%s272] sm:$0xff]
          %v340 = vld [vmem:[%s272 + $0x8] sm:$0xff]
          %v341 = vld [vmem:[%s272 + $0x10] sm:$0xff]
          %v342 = vld [vmem:[%s272 + $0x18] sm:$0xff]
          %v343 = vmax.f32 %v340, %v341
          %v344 = vmax.f32 %v343, %v342
          %v345 = vsub.f32 %v339, %v344
          %v346 = vsub.f32 %v340, %v344
          %v347 = vsub.f32 %v341, %v344
          %v348 = vsub.f32 %v342, %v344
          %v349 = vmul.f32 %v345, 1.442695
          %v350 = vpow.pop %v349
          %v351 = vmul.f32 %v346, 1.442695
          %v352 = vpow.pop %v351
          %v353 = vmul.f32 %v347, 1.442695
          %v354 = vpow.pop %v353
          %v355 = vmul.f32 %v348, 1.442695
          %v356 = vpow.pop %v355
          %v357 = vadd.f32 %v350, %v352
          %v358 = vadd.f32 %v357, %v354
          %v359 = vadd.f32 %v358, %v356
          %v360 = vrcp.pop %v359
          %v361 = vmul.f32 1.0, %v360
          %v362 = vld [vmem:[%s281] sm:$0xff]
          %v363 = vsub.f32 1.0, %v362
          %v364 = vmul.f32 %v363, %v361
          %v365 = vadd.f32 %v364, 0.0
          %v366 = vadd.f32 %v365, 0.0
          %v367 = vadd.f32 %v363, 0.0
          %v368 = vadd.f32 %v367, 0.0
          %v369 = vadd.f32 %v361, 0.0
          %v370 = vadd.f32 %v369, 0.0
          %v371 = vld [vmem:[%s306] sm:$0xff]
          %v372 = vadd.f32 %v371, %v366
          %373 = vst [vmem:[%s306] sm:$0xff] %v372
          %v374 = vld [vmem:[%s313] sm:$0xff]
          %v375 = vadd.f32 %v374, %v368
          %376 = vst [vmem:[%s313] sm:$0xff] %v375
          %v377 = vld [vmem:[%s320] sm:$0xff]
          %v378 = vadd.f32 %v377, %v370
          %379 = vst [vmem:[%s320] sm:$0xff] %v378
        $region44: #{tpu_custom_call.1} parent=27 // pred_fallthru
          _
        %p380 = scmp.ge.s32.totalorder %s327, 0
        // Predicated region
        $region45: #{tpu_custom_call.1} parent=27 // pred_check
          %p381 = pneg %p380
        $region46: #{tpu_custom_call.1} parent=27 // pred_check_branch
          %383 = sbr.rel (%p381) target = $region48
        $region47: #{tpu_custom_call.1} parent=27 // pred_region
          %v384 = vld [vmem:[%s272] sm:$0xff]
          %v385 = vld [vmem:[%s272 + $0x8] sm:$0xff]
          %v386 = vld [vmem:[%s272 + $0x10] sm:$0xff]
          %v387 = vld [vmem:[%s272 + $0x18] sm:$0xff]
          %v388 = vmax.f32 %v385, %v386
          %v389 = vmax.f32 %v388, %v387
          %v390 = vsub.f32 %v384, %v389
          %v391 = vsub.f32 %v385, %v389
          %v392 = vsub.f32 %v386, %v389
          %v393 = vsub.f32 %v387, %v389
          %v394 = vmul.f32 %v390, 1.442695
          %v395 = vpow.pop %v394
          %v396 = vmul.f32 %v391, 1.442695
          %v397 = vpow.pop %v396
          %v398 = vmul.f32 %v392, 1.442695
          %v399 = vpow.pop %v398
          %v400 = vmul.f32 %v393, 1.442695
          %v401 = vpow.pop %v400
          %v402 = vadd.f32 %v395, %v397
          %v403 = vadd.f32 %v402, %v399
          %v404 = vadd.f32 %v403, %v401
          %v405 = vrcp.pop %v404
          %v406 = vmul.f32 1.0, %v405
          %v407 = vld [vmem:[%s281] sm:$0xff]
          %v408 = vsub.f32 1.0, %v407
          %v409 = vlaneseq
          %v410 = vshrl.u32 %v409, 7
          %v411 = vlaneseq
          %v412 = vand.u32 %v411, 127
          %s413 = smul.u32 %s327, 8
          %s414 = sadd.s32 %s413, 0
          %v415 = vstv %s414
          %v416 = vadd.s32 %v415, %v410
          %v417 = vmul.u32 %v416, 128
          %v418 = vadd.s32 %v417, %v412
          %vm419 = vcmp.lt.s32.totalorder %v418, 256
          %v420 = vsel %vm419, %v406, 0.0
          %v421 = vsel %vm419, %v408, 0.0
          %v422 = vmul.f32 %v421, %v420
          %v423 = vadd.f32 %v422, 0.0
          %v424 = vadd.f32 %v423, 0.0
          %v425 = vadd.f32 %v421, 0.0
          %v426 = vadd.f32 %v425, 0.0
          %v427 = vadd.f32 %v420, 0.0
          %v428 = vadd.f32 %v427, 0.0
          %v429 = vld [vmem:[%s306] sm:$0xff]
          %v430 = vadd.f32 %v429, %v424
          %431 = vst [vmem:[%s306] sm:$0xff] %v430
          %v432 = vld [vmem:[%s313] sm:$0xff]
          %v433 = vadd.f32 %v432, %v426
          %434 = vst [vmem:[%s313] sm:$0xff] %v433
          %v435 = vld [vmem:[%s320] sm:$0xff]
          %v436 = vadd.f32 %v435, %v428
          %437 = vst [vmem:[%s320] sm:$0xff] %v436
        $region48: #{tpu_custom_call.1} parent=27 // pred_fallthru
          _
        %s438 = sand.u32 %s125, 1
        %s439 = scalar_lea.sflag [#allocation4], %s438
        %s440 = sand.u32 %s125, 1
        %s441 = smul.addr %s440, 8
        %s442 = scalar_lea.vmem [#allocation7], %s441
        %s443 = sand.u32 %s28, 1
        %s444 = scalar_lea.sflag [#allocation9], %s443
        %s445 = sand.u32 %s153, 1
        %s446 = smul.addr %s445, 8
        %s447 = scalar_lea.vmem [#allocation8], %s446
        %s448 = sand.u32 %s28, 1
        %s449 = scalar_lea.sflag [#allocation9], %s448
        %s450 = sand.u32 %s181, 1
        %s451 = smul.addr %s450, 8
        %s452 = scalar_lea.vmem [#allocation10], %s451
        // Predicated region
        $region49: #{tpu_custom_call.1} parent=27 // pred_check
          %p453 = pneg %p135
        $region50: #{tpu_custom_call.1} parent=27 // pred_check_branch
          %455 = sbr.rel (%p453) target = $region52
        $region51: #{tpu_custom_call.1} parent=27 // pred_region
          %s457 = ssub.s32 128, 128
          %458 = vsyncadd %s439, %s457
          %s459 = sadd.s32 %s34, %s33
          %s460 = smul.addr %s459, 128
          %s461 = scalar_lea.hbm %s2, %s460
          %s463 = sshll.u32 %s442, 4
          %s464 = int_to_ptr.vmem [resolvable:$true] %s463
          %466 = dma.vmem_to_hbm [thread:$0]  %s464, 128, %s461, %s439
        $region52: #{tpu_custom_call.1} parent=27 // pred_fallthru
          _
        // Predicated region
        $region53: #{tpu_custom_call.1} parent=27 // pred_check
          %p467 = pneg %p163
        $region54: #{tpu_custom_call.1} parent=27 // pred_check_branch
          %469 = sbr.rel (%p467) target = $region56
        $region55: #{tpu_custom_call.1} parent=27 // pred_region
          %s471 = ssub.s32 128, 128
          %472 = vsyncadd %s444, %s471
          %s473 = sadd.s32 %s34, %s33
          %s474 = smul.addr %s473, 128
          %s475 = scalar_lea.hbm %s3, %s474
          %s477 = sshll.u32 %s447, 4
          %s478 = int_to_ptr.vmem [resolvable:$true] %s477
          %480 = dma.vmem_to_hbm [thread:$0]  %s478, 128, %s475, %s444
        $region56: #{tpu_custom_call.1} parent=27 // pred_fallthru
          _
        // Predicated region
        $region57: #{tpu_custom_call.1} parent=27 // pred_check
          %p481 = pneg %p191
        $region58: #{tpu_custom_call.1} parent=27 // pred_check_branch
          %483 = sbr.rel (%p481) target = $region60
        $region59: #{tpu_custom_call.1} parent=27 // pred_region
          %s485 = ssub.s32 128, 128
          %486 = vsyncadd %s449, %s485
          %s487 = sadd.s32 %s34, %s33
          %s488 = smul.addr %s487, 128
          %s489 = scalar_lea.hbm %s4, %s488
          %s491 = sshll.u32 %s452, 4
          %s492 = int_to_ptr.vmem [resolvable:$true] %s491
          %494 = dma.vmem_to_hbm [thread:$0]  %s492, 128, %s489, %s449
        $region60: #{tpu_custom_call.1} parent=27 // pred_fallthru
          _
      $region28: #{tpu_custom_call.1} parent=5 // pred_fallthru
        _
      %p495 = scmp.le.s32.totalorder 2, %s23
      // Predicated region
      $region61: #{tpu_custom_call.1} parent=5 // pred_check
        %p496 = pneg %p495
      $region62: #{tpu_custom_call.1} parent=5 // pred_check_branch
        %498 = sbr.rel (%p496) target = $region64
      $region63: #{tpu_custom_call.1} parent=5 // pred_region
        %s499 = ssub.s32 %s23, 2
        // Predicated region
        $region65: #{tpu_custom_call.1} parent=63 // pred_check
          %p500 = pneg %p141
        $region66: #{tpu_custom_call.1} parent=63 // pred_check_branch
          %502 = sbr.rel (%p500) target = $region68
        $region67: #{tpu_custom_call.1} parent=63 // pred_region
          %s503 = sand.u32 %s126, 1
          %s504 = scalar_lea.sflag [#allocation4], %s503
          %s505 = sand.u32 %s126, 1
          %s506 = smul.addr %s505, 8
          %s507 = scalar_lea.vmem [#allocation7], %s506
          %508 = dma.done %s504, 128
        $region68: #{tpu_custom_call.1} parent=63 // pred_fallthru
          _
        // Predicated region
        $region69: #{tpu_custom_call.1} parent=63 // pred_check
          %p509 = pneg %p169
        $region70: #{tpu_custom_call.1} parent=63 // pred_check_branch
          %511 = sbr.rel (%p509) target = $region72
        $region71: #{tpu_custom_call.1} parent=63 // pred_region
          %s512 = sand.u32 %s29, 1
          %s513 = scalar_lea.sflag [#allocation9], %s512
          %s514 = sand.u32 %s154, 1
          %s515 = smul.addr %s514, 8
          %s516 = scalar_lea.vmem [#allocation8], %s515
          %517 = dma.done %s513, 128
        $region72: #{tpu_custom_call.1} parent=63 // pred_fallthru
          _
        // Predicated region
        $region73: #{tpu_custom_call.1} parent=63 // pred_check
          %p518 = pneg %p197
        $region74: #{tpu_custom_call.1} parent=63 // pred_check_branch
          %520 = sbr.rel (%p518) target = $region76
        $region75: #{tpu_custom_call.1} parent=63 // pred_region
          %s521 = sand.u32 %s29, 1
          %s522 = scalar_lea.sflag [#allocation9], %s521
          %s523 = sand.u32 %s182, 1
          %s524 = smul.addr %s523, 8
          %s525 = scalar_lea.vmem [#allocation10], %s524
          %526 = dma.done %s522, 128
        $region76: #{tpu_custom_call.1} parent=63 // pred_fallthru
          _
      $region64: #{tpu_custom_call.1} parent=5 // pred_fallthru
        _
    $region6: #{tpu_custom_call.1} parent=1 // loop_footer
      %s27 = sadd.s32 1, %s23
    $region7: #{tpu_custom_call.1} parent=1 // loop_footer_branch
      %22 = sbr.rel target = $region3
    $region8: #{tpu_custom_call.1} parent=1 // loop_exit
      _
    %527 = vsyncpa [#allocation3], 1
    %s528 = scalar_lea.sflag [#allocation3], 1
    %529 = vsyncpa %s528, 1
    %530 = vsyncpa [#allocation6], 1
    %s531 = scalar_lea.sflag [#allocation6], 1
    %532 = vsyncpa %s531, 1
    %533 = vsyncpa [#allocation4], 1
    %s534 = scalar_lea.sflag [#allocation4], 1
    %535 = vsyncpa %s534, 1
    %536 = vsyncpa [#allocation9], 1
    %s537 = scalar_lea.sflag [#allocation9], 1
    %538 = vsyncpa %s537, 1

</llo_original>
